<compile_context>
chip_gen: v6e
topology: v6e:2x2x1
jax: 0.10.0
libtpu: 0.0.40
codegen_flags: <defaults>
</compile_context>

<pallas_src>
import jax
import jax.numpy as jnp
from jax.experimental import pallas as pl
from jax.experimental.pallas import tpu as pltpu


def _round_up(x, m):
    return ((x + m - 1) // m) * m


def _fused_embed_kernel(x_ref, w_ref, o_ref):
    """One (tile_m, d_model) output tile: o = x_cat @ W_cat (f32 accumulation)."""
    o_ref[...] = jnp.dot(
        x_ref[...], w_ref[...], preferred_element_type=jnp.float32
    ).astype(o_ref.dtype)


def prepare_weights(conv_weight, lin_weight=None):
    """One-time (init-time) weight preparation.

      conv_weight: (d_model, c_in, 3)  -- nn.Conv1d layout
      lin_weight : (d_model, d_inp)    -- nn.Linear layout (or None: no x_mark path)

    Returns a dict with concatenated-K weight slabs:
      'conv_only': (w[Kc_p, d_model], ktot, ktot_p)   rows = [W0; W1; W2]
      'full'     : (w[Kt_p, d_model], ktot, ktot_p)   rows = [W0; W1; W2; Wt]
    K is zero-padded up to a multiple of 8 (f32 sublanes); padded rows are zero
    so any values in the padded input columns contribute nothing.
    """
    d_model, c_in, k = conv_weight.shape
    assert k == 3, "TokenEmbedding uses kernel_size=3"

    conv_rows = jnp.concatenate(
        [conv_weight[:, :, 0].T, conv_weight[:, :, 1].T, conv_weight[:, :, 2].T],
        axis=0)                                            # (3*c_in, d_model)

    def finish(rows):
        ktot = rows.shape[0]
        ktot_p = _round_up(ktot, 8)
        if ktot_p != ktot:
            rows = jnp.pad(rows, ((0, ktot_p - ktot), (0, 0)))
        return rows, ktot, ktot_p

    prepared = {"d_model": d_model, "c_in": c_in, "conv_only": finish(conv_rows)}
    if lin_weight is not None:
        prepared["full"] = finish(
            jnp.concatenate([conv_rows, lin_weight.T], axis=0))
        prepared["d_inp"] = lin_weight.shape[1]
    return prepared


def _pick_tile_m(M, ktot_p, d_model, in_itemsize, out_itemsize, requested):
    """Largest row tile whose double-buffered in+out blocks fit a conservative
    12 MiB budget (safe under v5e's 16 MiB default scoped VMEM; also fine for
    v6e/v7x defaults), capped by the requested value and by M."""
    budget = 12 * 1024 * 1024
    per_row = 2 * (ktot_p * in_itemsize + d_model * out_itemsize)
    cap = max(256, (budget // per_row) // 256 * 256)
    tm = min(requested, cap, M)
    if tm < M:
        tm = max(8, (tm // 8) * 8)   # sublane-aligned when actually tiling
    return tm


def data_embedding_wo_pos(x, x_mark, prepared, *, tile_m=4096, out_dtype=None):
    """x: (B, c_in, L) float32 (channels-first, as the PyTorch TokenEmbedding expects).
       x_mark: (B, L, d_inp) float32 or None.
       prepared: output of prepare_weights().
    Returns (B, L, d_model) == eval-mode DataEmbedding_wo_pos(x, x_mark)."""
    B, c_in, L = x.shape
    d_model = prepared["d_model"]
    M = B * L
    out_dtype = x.dtype if out_dtype is None else out_dtype

    # Channels-last activations; the k=3 circular conv becomes three shifted
    # column blocks of one concatenated input (single fused XLA op feeding the
    # kernel; only c_in << d_model columns so input traffic stays small).
    x_t = jnp.transpose(x, (0, 2, 1))                      # (B, L, c_in)
    parts = [jnp.roll(x_t, 1, axis=1),                     # x[(l-1) mod L]
             x_t,                                          # x[l]
             jnp.roll(x_t, -1, axis=1)]                    # x[(l+1) mod L]
    if x_mark is None:
        w_cat, ktot, ktot_p = prepared["conv_only"]        # temporal path skipped
    else:
        w_cat, ktot, ktot_p = prepared["full"]
        parts.append(x_mark.astype(x.dtype))
    if ktot_p != ktot:                                     # K padding (weights are zero there)
        parts.append(jnp.zeros((B, L, ktot_p - ktot), dtype=x.dtype))
    x_cat = jnp.concatenate(parts, axis=-1).reshape(M, ktot_p)

    in_itemsize = jnp.dtype(x.dtype).itemsize
    out_itemsize = jnp.dtype(out_dtype).itemsize
    tm = _pick_tile_m(M, ktot_p, d_model, in_itemsize, out_itemsize, tile_m)
    grid_m = pl.cdiv(M, tm)

    flops = 2 * M * ktot_p * d_model
    bytes_accessed = (M * ktot_p * in_itemsize          # activations in
                      + ktot_p * d_model * in_itemsize  # weights (once)
                      + M * d_model * out_itemsize)     # output

    y2d = pl.pallas_call(
        _fused_embed_kernel,
        out_shape=jax.ShapeDtypeStruct((M, d_model), out_dtype),
        grid_spec=pltpu.PrefetchScalarGridSpec(
            num_scalar_prefetch=0,
            grid=(grid_m,),
            in_specs=[
                pl.BlockSpec((tm, ktot_p), lambda i: (i, 0)),
                # Weight block pinned at (0, 0): DMA'd once, VMEM-resident.
                pl.BlockSpec((ktot_p, d_model), lambda i: (0, 0)),
            ],
            # Output last dim == full d_model: lane-dense when d_model % 128 == 0,
            # masked ragged-lane stores otherwise (never a post-kernel slice pass).
            out_specs=pl.BlockSpec((tm, d_model), lambda i: (i, 0)),
        ),
        compiler_params=pltpu.CompilerParams(
            dimension_semantics=("parallel",),   # shard row tiles across TCs
        ),
        cost_estimate=pl.CostEstimate(
            flops=flops, transcendentals=0, bytes_accessed=bytes_accessed),
    )(x_cat, w_cat)

    # TODO(synk): training-mode nn.Dropout(p=0.1) omitted (eval-mode identity);
    # PyTorch dropout RNG cannot be reproduced bit-exactly on TPU anyway.
    return y2d.reshape(B, L, d_model)


if __name__ == "__main__":
    # Small demo shapes: batch=2, c_in=4 input channels, L=16 time steps,
    # d_model=32 (deliberately NOT a multiple of 128 to exercise masked stores),
    # freq='h' -> d_inp=4 time features.
    B, c_in, L, d_model, d_inp = 2, 4, 16, 32, 4

    key = jax.random.PRNGKey(0)
    kx, km, kc, kl = jax.random.split(key, 4)

    x = jax.random.normal(kx, (B, c_in, L), dtype=jnp.float32)        # TokenEmbedding input
    x_mark = jax.random.normal(km, (B, L, d_inp), dtype=jnp.float32)  # time features

    # Parameters in native PyTorch layouts.
    conv_weight = 0.1 * jax.random.normal(kc, (d_model, c_in, 3), dtype=jnp.float32)
    bound = 1.0 / jnp.sqrt(jnp.float32(d_inp))
    lin_weight = jax.random.uniform(kl, (d_model, d_inp), minval=-bound, maxval=bound,
                                    dtype=jnp.float32)

    prepared = prepare_weights(conv_weight, lin_weight)   # done once at "init" time

    y = data_embedding_wo_pos(x, x_mark, prepared)
    y = jax.block_until_ready(y)
    y_novalue_mark = data_embedding_wo_pos(x, None, prepared)  # x_mark=None path
    y_novalue_mark = jax.block_until_ready(y_novalue_mark)

    # Independent reference: circular pad + lax.conv (== nn.Conv1d padding_mode='circular',
    # bias=False) transposed, plus the bias-free linear on x_mark; dropout(eval) = identity.
    x_pad = jnp.concatenate([x[:, :, -1:], x, x[:, :, :1]], axis=2)
    y_conv = jax.lax.conv_general_dilated(
        x_pad, conv_weight, window_strides=(1,), padding="VALID",
        dimension_numbers=("NCH", "OIH", "NCH"),
        precision=jax.lax.Precision.HIGHEST)                          # (B, d_model, L)
    value_ref = jnp.transpose(y_conv, (0, 2, 1))                      # (B, L, d_model)
    temporal_ref = jnp.einsum("bld,md->blm", x_mark, lin_weight,
                              precision=jax.lax.Precision.HIGHEST)
    y_ref = value_ref + temporal_ref

    assert y.shape == (B, L, d_model)
    err1 = float(jnp.max(jnp.abs(y - y_ref)))
    assert jnp.allclose(y, y_ref, atol=1e-4, rtol=1e-4), err1
    err2 = float(jnp.max(jnp.abs(y_novalue_mark - value_ref)))
    assert jnp.allclose(y_novalue_mark, value_ref, atol=1e-4, rtol=1e-4), err2

    print("KERNEL_OK")
</pallas_src>

<mosaic_0001>
module attributes {stable_mosaic.version = 11 : i64} {
  func.func @_fused_embed_kernel(%arg0: i32, %arg1: memref<32x16xf32, #tpu.memory_space<vmem>>, %arg2: memref<16x32xf32, #tpu.memory_space<vmem>>, %arg3: memref<32x32xf32, #tpu.memory_space<vmem>>) attributes {dimension_semantics = [#tpu.dimension_semantics<parallel>], iteration_bounds = array<i64: 1>, scalar_prefetch = 0 : i64, scratch_operands = 0 : i64, tpu.core_type = #tpu.core_type<tc>, window_params = [{transform_indices = @transform_0, window_bounds = array<i64: 32, 16>}, {pipeline_mode = #tpu.pipeline_mode<synchronous>, transform_indices = @transform_1, window_bounds = array<i64: 16, 32>}, {transform_indices = @transform_2, window_bounds = array<i64: 32, 32>}]} {
    %c0 = arith.constant 0 : index
    %c0_0 = arith.constant 0 : index
    %0 = vector.load %arg1[%c0, %c0_0] : memref<32x16xf32, #tpu.memory_space<vmem>>, vector<32x16xf32>
    %c0_1 = arith.constant 0 : index
    %c0_2 = arith.constant 0 : index
    %1 = vector.load %arg2[%c0_1, %c0_2] : memref<16x32xf32, #tpu.memory_space<vmem>>, vector<16x32xf32>
    %cst = arith.constant dense<0.000000e+00> : vector<32x32xf32>
    %2 = tpu.matmul %0, %1, %cst {dimension_numbers = #tpu.dot_dimension_numbers<[1], [0], [0], [1], [0, 0, 1, 1], [], []>} : vector<32x16xf32>, vector<16x32xf32>, vector<32x32xf32> -> vector<32x32xf32>
    %c0_3 = arith.constant 0 : index
    %c0_4 = arith.constant 0 : index
    %3 = vector.load %arg3[%c0_3, %c0_4] : memref<32x32xf32, #tpu.memory_space<vmem>>, vector<32x32xf32>
    tpu.vector_store %arg3[%c0_3, %c0_4], %2 {strides = array<i32>} : memref<32x32xf32, #tpu.memory_space<vmem>>, vector<32x32xf32>,
    return
  }
  func.func @transform_0(%arg0: i32) -> (i32, i32) {
    %c0_i32 = arith.constant 0 : i32
    %c0_i32_0 = arith.constant 0 : i32
    return %arg0, %c0_i32 : i32, i32
  }
  func.func @transform_1(%arg0: i32) -> (i32, i32) {
    %c0_i32 = arith.constant 0 : i32
    %c0_i32_0 = arith.constant 0 : i32
    %c0_i32_1 = arith.constant 0 : i32
    return %c0_i32, %c0_i32_0 : i32, i32
  }
  func.func @transform_2(%arg0: i32) -> (i32, i32) {
    %c0_i32 = arith.constant 0 : i32
    %c0_i32_0 = arith.constant 0 : i32
    return %arg0, %c0_i32 : i32, i32
  }
}

</mosaic_0001>

<llo_original>
// kernel: tpu_custom_call.1
$region0: #{tpu_custom_call.1}
  #allocation0 [shape = 'u32[]', space=smem, size = 0x4, offset = 0x4, fixed_abs, tag = 'smem constant byte address 0x4 - core index']
  #allocation1 [shape = 'u32[144,128]{1,0:T(1,128)}', space=vmem, size = 0x12000, scoped, tag = 'internal scratch']
  %s0 = inlined_call_operand.vmem [shape: f32[32,16], index: 0, kind: input, shape index: {}]
  %s1 = inlined_call_operand.vmem [shape: f32[16,32], index: 1, kind: input, shape index: {}]
  %s2 = inlined_call_operand.hbm [shape: f32[32,32], index: 2, kind: output, shape index: {}]
  %s3 = sld [smem:[#allocation0]]
  $region18: #{tpu_custom_call.1} parent=0
    _
  %s5 = ssub.s32 1, %s3
  %s6 = scalar_select 0, %s5, %s3
  $region1: #{tpu_custom_call.1} parent=0
    #allocation2 [shape = 'u8[16384]{0}', space=vmem, size = 0x4000, scoped, tag = 'output window, operand 0, single buffered']
    #allocation3 [shape = 's32[1]{0}', space=sflag, size = 0x4, scoped, tag = 'scoped memory for tpu_custom_call.1']
    %7 = vsyncpa [#allocation3], 0
    // Predicated region
    $region2: #{tpu_custom_call.1} parent=1 // pred_check
      _
    $region3: #{tpu_custom_call.1} parent=1 // pred_check_branch
      %9 = sbr.rel (0) target = $region5
    $region4: #{tpu_custom_call.1} parent=1 // pred_region
      _
    $region5: #{tpu_custom_call.1} parent=1 // pred_fallthru
      _
    // Predicated region
    $region6: #{tpu_custom_call.1} parent=1 // pred_check
      _
    $region7: #{tpu_custom_call.1} parent=1 // pred_check_branch
      %11 = sbr.rel (0) target = $region9
    $region8: #{tpu_custom_call.1} parent=1 // pred_region
      _
    $region9: #{tpu_custom_call.1} parent=1 // pred_fallthru
      _
    %v12 = vld [vmem:[%s0] sm:$0xff]
    %v13 = vld [vmem:[%s0 + $0x8] sm:$0xff]
    %v14 = vld [vmem:[%s0 + $0x10] sm:$0xff]
    %v15 = vld [vmem:[%s0 + $0x18] sm:$0xff]
    %v16 = vld [vmem:[%s1] sm:$0xff]
    %v17 = vld [vmem:[%s1 + $0x8] sm:$0xff]
    %vm18 = vcmask 130048
    %v20 = vsel %vm18, %v12, 0
    %v23 = vsel %vm18, %v13, 0
    %v26 = vsel %vm18, %v14, 0
    %v29 = vsel %vm18, %v15, 0
    %31 = vmatprep.subr.mxu0 0.0
    %32 = vmatpush1.msra.mxu0 0.0
    %33 = vmatprep.subr.mxu0 0.0
    %34 = vmatpush1.msra.mxu0 0.0
    %35 = vmatprep.subr.mxu0 0.0
    %36 = vmatpush1.msra.mxu0 0.0
    %37 = vmatprep.subr.mxu0 0.0
    %38 = vmatpush1.msra.mxu0 0.0
    %39 = vmatprep.subr.mxu0 0.0
    %40 = vmatpush1.msra.mxu0 0.0
    %41 = vmatprep.subr.mxu0 0.0
    %42 = vmatpush1.msra.mxu0 0.0
    %43 = vmatprep.subr.mxu0 0.0
    %44 = vmatpush1.msra.mxu0 0.0
    %45 = vmatprep.subr.mxu0 0.0
    %46 = vmatpush1.msra.mxu0 0.0
    %47 = vmatprep.subr.mxu0 0.0
    %48 = vmatpush1.msra.mxu0 0.0
    %49 = vmatprep.subr.mxu0 0.0
    %50 = vmatpush1.msra.mxu0 0.0
    %51 = vmatprep.subr.mxu0 0.0
    %52 = vmatpush1.msra.mxu0 0.0
    %53 = vmatprep.subr.mxu0 0.0
    %54 = vmatpush1.msra.mxu0 0.0
    %55 = vmatprep.subr.mxu0 0.0
    %56 = vmatpush1.msra.mxu0 0.0
    %57 = vmatprep.subr.mxu0 0.0
    %58 = vmatpush1.msra.mxu0 0.0
    %59 = vmatprep.subr.mxu0 0.0
    %60 = vmatpush1.msra.mxu0 %v17
    %61 = vmatprep.subr.mxu0 0.0
    %62 = vmatpush1.msra.mxu0 %v16
    %63 = vmatprep.subr.mxu0 0.0
    %64 = vmatpush2.msra.mxu0 0.0
    %65 = vmatprep.subr.mxu0 0.0
    %66 = vmatpush2.msra.mxu0 0.0
    %67 = vmatprep.subr.mxu0 0.0
    %68 = vmatpush2.msra.mxu0 0.0
    %69 = vmatprep.subr.mxu0 0.0
    %70 = vmatpush2.msra.mxu0 0.0
    %71 = vmatprep.subr.mxu0 0.0
    %72 = vmatpush2.msra.mxu0 0.0
    %73 = vmatprep.subr.mxu0 0.0
    %74 = vmatpush2.msra.mxu0 0.0
    %75 = vmatprep.subr.mxu0 0.0
    %76 = vmatpush2.msra.mxu0 0.0
    %77 = vmatprep.subr.mxu0 0.0
    %78 = vmatpush2.msra.mxu0 0.0
    %79 = vmatprep.subr.mxu0 0.0
    %80 = vmatpush2.msra.mxu0 0.0
    %81 = vmatprep.subr.mxu0 0.0
    %82 = vmatpush2.msra.mxu0 0.0
    %83 = vmatprep.subr.mxu0 0.0
    %84 = vmatpush2.msra.mxu0 0.0
    %85 = vmatprep.subr.mxu0 0.0
    %86 = vmatpush2.msra.mxu0 0.0
    %87 = vmatprep.subr.mxu0 0.0
    %88 = vmatpush2.msra.mxu0 0.0
    %89 = vmatprep.subr.mxu0 0.0
    %90 = vmatpush2.msra.mxu0 0.0
    %91 = vmatprep.subr.mxu0 0.0
    %92 = vmatpush2.msra.mxu0 0.0
    %93 = vmatprep.subr.mxu0 0.0
    %94 = vmatpush2.msra.mxu0 0.0
    %95 = vmatprep.mubr.f32.mxu0 0.0
    %96 = vmatmul.mubr.f32.gmra.mxu0 %v20
    %v97 = vpop.f32.mrf.mxu0
    %v98 = vadd.f32 0.0, %v97
    %v99 = vpop.f32.mrf.mxu0
    %100 = vmatprep.mubr.f32.mxu0 0.0
    %101 = vmatmul.mubr.f32.gmra.mxu0 %v23
    %v102 = vpop.f32.mrf.mxu0
    %v103 = vadd.f32 0.0, %v102
    %v104 = vpop.f32.mrf.mxu0
    %105 = vmatprep.mubr.f32.mxu0 0.0
    %106 = vmatmul.mubr.f32.gmra.mxu0 %v26
    %v107 = vpop.f32.mrf.mxu0
    %v108 = vadd.f32 0.0, %v107
    %v109 = vpop.f32.mrf.mxu0
    %110 = vmatprep.mubr.f32.mxu0 0.0
    %111 = vmatmul.mubr.f32.gmra.mxu0 %v29
    %v112 = vpop.f32.mrf.mxu0
    %v113 = vadd.f32 0.0, %v112
    %v114 = vpop.f32.mrf.mxu0
    %115 = vdwg.mxu0
    %vm116 = vcmask 261120
    %117 = vst.msk [vmem:[#allocation2] sm:$0xff] %vm116, %v98
    %118 = vst.msk [vmem:[#allocation2 + $0x8] sm:$0xff] %vm116, %v103
    %119 = vst.msk [vmem:[#allocation2 + $0x10] sm:$0xff] %vm116, %v108
    %120 = vst.msk [vmem:[#allocation2 + $0x18] sm:$0xff] %vm116, %v113
    // Predicated region
    $region10: #{tpu_custom_call.1} parent=1 // pred_check
      _
    $region11: #{tpu_custom_call.1} parent=1 // pred_check_branch
      %122 = sbr.rel (0) target = $region13
    $region12: #{tpu_custom_call.1} parent=1 // pred_region
      %s124 = ssub.s32 512, 512
      %125 = vsyncadd [#allocation3], %s124
      %s126 = sshll.u32 [#allocation2], 4
      %s127 = int_to_ptr.vmem [resolvable:$true] %s126
      %132 = dma.vmem_to_hbm [thread:$0]  %s127, 512, %s2, [#allocation3], 128, 128, 8
    $region13: #{tpu_custom_call.1} parent=1 // pred_fallthru
      _
    // Predicated region
    $region14: #{tpu_custom_call.1} parent=1 // pred_check
      _
    $region15: #{tpu_custom_call.1} parent=1 // pred_check_branch
      %134 = sbr.rel (0) target = $region17
    $region16: #{tpu_custom_call.1} parent=1 // pred_region
      %135 = dma.done [#allocation3], 512
    $region17: #{tpu_custom_call.1} parent=1 // pred_fallthru
      _
    %136 = vsyncpa [#allocation3], 1

</llo_original>
